<compile_context>
chip_gen: v5e
topology: v5e:2x2
jax: 0.10.0
libtpu: 0.0.40
codegen_flags: <defaults>
</compile_context>

<pallas_src>
import math

import jax
import jax.numpy as jnp
from jax.experimental import pallas as pl
from jax.experimental.pallas import tpu as pltpu


# ----------------------------------------------------------------------------
# Kernel 1: fused masked mean pooling (all levels) + progress Linear
# ----------------------------------------------------------------------------

def _make_pool_progress_kernel(num_levels, channels):
    def kernel(*refs):
        # refs layout: src_0, msk_0, ..., src_{L-1}, msk_{L-1}, pw, pb, out
        pw_ref = refs[2 * num_levels]
        pb_ref = refs[2 * num_levels + 1]
        out_ref = refs[-1]
        acc = pb_ref[...]                                    # (1, Npad), broadcasts over B
        for l in range(num_levels):                          # static unroll (L is small)
            src = refs[2 * l][...]                           # (B, C, HW_l)
            msk = refs[2 * l + 1][...]                       # (B, 1, HW_l), 1 = valid pixel
            num = jnp.sum(src * msk, axis=-1)                # (B, C)
            den = jnp.sum(msk, axis=-1)                      # (B, 1)
            # NOTE: like the PyTorch reference, a fully-padded image gives NaN here.
            pooled = num / den                               # (B, C)
            acc = acc + jnp.dot(pooled,
                                pw_ref[l * channels:(l + 1) * channels, :],
                                preferred_element_type=jnp.float32)
        out_ref[...] = acc                                   # (B, Npad) lane-dense store
    return kernel


def pool_progress_pallas(srcs, masks, progress_w, progress_b):
    """masked_mean over every level + table_progress Linear, one pallas_call.

    srcs[l]: (B, C, H_l, W_l); masks[l]: (B, H_l, W_l) with True on padded pixels.
    Returns progress_score of shape (B, 3).
    """
    B, C = srcs[0].shape[:2]
    L = len(srcs)
    n_out = progress_w.shape[1]
    NPAD = 128                                               # lane-dense output slab

    pw_pad = jnp.zeros((C * L, NPAD), jnp.float32).at[:, :n_out].set(progress_w)
    pb_pad = jnp.zeros((1, NPAD), jnp.float32).at[0, :n_out].set(progress_b)

    flat_inputs, in_specs = [], []
    for l in range(L):
        H, W = srcs[l].shape[2], srcs[l].shape[3]
        flat_inputs.append(srcs[l].reshape(B, C, H * W).astype(jnp.float32))
        flat_inputs.append((~masks[l]).astype(jnp.float32).reshape(B, 1, H * W))
        in_specs.append(pl.BlockSpec((B, C, H * W), lambda i: (0, 0, 0)))
        in_specs.append(pl.BlockSpec((B, 1, H * W), lambda i: (0, 0, 0)))
    flat_inputs += [pw_pad, pb_pad]
    in_specs += [pl.BlockSpec((C * L, NPAD), lambda i: (0, 0)),
                 pl.BlockSpec((1, NPAD), lambda i: (0, 0))]

    # TODO(synk): at production Deformable-DETR resolution (C=256, HW~13k-20k/level)
    # tile the HW axis with an "arbitrary" reduction grid axis + VMEM accumulator
    # (and use an MXU contraction against the mask) so blocks fit v7x's 64 MiB VMEM.
    out = pl.pallas_call(
        _make_pool_progress_kernel(L, C),
        out_shape=jax.ShapeDtypeStruct((B, NPAD), jnp.float32),
        grid=(1,),
        in_specs=in_specs,
        out_specs=pl.BlockSpec((B, NPAD), lambda i: (0, 0)),
        compiler_params=pltpu.CompilerParams(dimension_semantics=("arbitrary",)),
    )(*flat_inputs)
    return out[:, :n_out]


# ----------------------------------------------------------------------------
# Kernel 2: fused DETR heads (class + bbox MLP + reference add + amount head)
# ----------------------------------------------------------------------------

def _make_heads_kernel(ncls, nsig, out_width):
    def kernel(hs_ref, ref4_ref, wx_ref, bx_ref,
               w1_ref, b1_ref, w2_ref, b2_ref, w3_ref, b3_ref, out_ref):
        x = hs_ref[...]                                      # (TM, D) row tile
        # One MXU pass for every narrow x-head: [class | amount | amount-weight].
        xh = jnp.dot(x, wx_ref[...], preferred_element_type=jnp.float32) + bx_ref[...]
        logits = xh[:, :ncls]                                # (TM, Ncls)
        amt_s = xh[:, ncls:ncls + nsig]                      # (TM, S)
        amt_w = xh[:, ncls + nsig:ncls + 2 * nsig]           # (TM, S)

        # bbox 3-layer MLP (ReLU on the first two layers).
        h = jnp.maximum(
            jnp.dot(x, w1_ref[...], preferred_element_type=jnp.float32) + b1_ref[...], 0.0)
        h = jnp.maximum(
            jnp.dot(h, w2_ref[...], preferred_element_type=jnp.float32) + b2_ref[...], 0.0)
        tmp = jnp.dot(h, w3_ref[...], preferred_element_type=jnp.float32) + b3_ref[...]  # (TM, 4)

        # inverse_sigmoid(reference); columns 2,3 (and padded rows) hold 0.5 so they add 0.
        r = jnp.clip(ref4_ref[...], 0.0, 1.0)
        inv = jnp.log(jnp.maximum(r, 1e-5) / jnp.maximum(1.0 - r, 1e-5))
        boxes = jax.nn.sigmoid(tmp + inv)                    # (TM, 4)

        # amount mixture head (amount_type == 3).  Computed for every row; the
        # wrapper keeps only the last decoder layer's rows (cost is negligible).
        preds = jax.nn.sigmoid(amt_s)
        wmix = jax.nn.softmax(amt_w, axis=-1)
        amount = jnp.sum(preds * wmix, axis=-1, keepdims=True)  # (TM, 1)

        pad = jnp.zeros((x.shape[0], out_width - (ncls + 4 + 1)), jnp.float32)
        # Single lane-dense (TM, 128) store instead of three narrow masked stores.
        out_ref[...] = jnp.concatenate([logits, boxes, amount, pad], axis=-1)
    return kernel


def detr_heads_pallas(hs, refs, params, row_tile=128):
    """hs: (L, B, Q, D); refs: (L, B, Q, 2).

    Returns (outputs_class (L,B,Q,Ncls), outputs_coord (L,B,Q,4), amount (B,Q,1)).
    """
    L, B, Q, D = hs.shape
    M = L * B * Q
    ncls = params["class_w"].shape[1]
    nsig = params["amount_w"].shape[1]
    OUT_W = 128
    assert ncls + 4 + 1 <= OUT_W

    # Row-tile the flattened (L*B*Q) axis: pipelines VMEM at production sizes
    # and lets the "parallel" grid axis shard rows across TensorCores.
    TM = row_tile
    M_pad = pl.cdiv(M, TM) * TM

    hs_flat = jnp.pad(hs.reshape(M, D).astype(jnp.float32),
                      ((0, M_pad - M), (0, 0)))
    # Pad reference points (both the two missing columns and the padded rows)
    # with 0.5 -> inverse_sigmoid(0.5) == 0, so padding contributes nothing.
    ref4 = jnp.pad(refs.reshape(M, 2).astype(jnp.float32),
                   ((0, M_pad - M), (0, 2)), constant_values=0.5)

    # Pack the narrow x-heads into one weight / bias.
    wx = jnp.concatenate(
        [params["class_w"], params["amount_w"], params["amount_ww"]], axis=1)
    bx = jnp.concatenate(
        [params["class_b"], params["amount_b"], params["amount_wb"]])[None, :]

    bcast = lambda shape: pl.BlockSpec(shape, lambda i: (0, 0))
    rows = lambda shape: pl.BlockSpec(shape, lambda i: (i, 0))
    slab = pl.pallas_call(
        _make_heads_kernel(ncls, nsig, OUT_W),
        out_shape=jax.ShapeDtypeStruct((M_pad, OUT_W), jnp.float32),
        grid=(M_pad // TM,),
        in_specs=[
            rows((TM, D)), rows((TM, 4)),
            bcast((D, ncls + 2 * nsig)), bcast((1, ncls + 2 * nsig)),
            bcast((D, D)), bcast((1, D)),
            bcast((D, D)), bcast((1, D)),
            bcast((D, 4)), bcast((1, 4)),
        ],
        out_specs=rows((TM, OUT_W)),
        compiler_params=pltpu.CompilerParams(dimension_semantics=("parallel",)),
    )(hs_flat, ref4, wx, bx,
      params["bbox_w1"], params["bbox_b1"].reshape(1, -1),
      params["bbox_w2"], params["bbox_b2"].reshape(1, -1),
      params["bbox_w3"], params["bbox_b3"].reshape(1, -1))

    slab = slab[:M]
    outputs_class = slab[:, :ncls].reshape(L, B, Q, ncls)
    outputs_coord = slab[:, ncls:ncls + 4].reshape(L, B, Q, 4)
    amount_pred = slab[(L - 1) * B * Q:, ncls + 4:ncls + 5].reshape(B, Q, 1)
    return outputs_class, outputs_coord, amount_pred


# ----------------------------------------------------------------------------
# Parameters / transformer stub / module forward
# ----------------------------------------------------------------------------

def init_params(key, hidden_dim, num_classes, num_feature_levels, num_queries,
                n_amount_sigmoid=5):
    bias_value = -math.log((1.0 - 0.01) / 0.01)
    ks = jax.random.split(key, 12)
    w = lambda k, shape: jax.random.normal(k, shape, jnp.float32) * 0.02
    return {
        # class_embed
        "class_w": w(ks[0], (hidden_dim, num_classes)),
        "class_b": jnp.full((num_classes,), bias_value, jnp.float32),
        # bbox_embed MLP(hidden, hidden, 4, 3)
        "bbox_w1": w(ks[1], (hidden_dim, hidden_dim)),
        "bbox_b1": w(ks[2], (hidden_dim,)),
        "bbox_w2": w(ks[3], (hidden_dim, hidden_dim)),
        "bbox_b2": w(ks[4], (hidden_dim,)),
        "bbox_w3": jnp.zeros((hidden_dim, 4), jnp.float32),           # init to 0
        "bbox_b3": jnp.array([0.0, 0.0, -2.0, -2.0], jnp.float32),    # bias[2:] = -2
        # table_progress_embed: Linear(hidden_dim * levels, 3)
        "progress_w": w(ks[5], (hidden_dim * num_feature_levels, 3)),
        "progress_b": jnp.full((3,), bias_value, jnp.float32),
        # food_amount_embed / food_amount_embed_weight (amount_type == 3)
        "amount_w": w(ks[6], (hidden_dim, n_amount_sigmoid)),
        "amount_b": jnp.full((n_amount_sigmoid,), bias_value, jnp.float32),
        "amount_ww": w(ks[7], (hidden_dim, n_amount_sigmoid)),
        "amount_wb": jnp.full((n_amount_sigmoid,), bias_value, jnp.float32),
        # query_embed (two_stage=False)
        "query_embed": w(ks[8], (num_queries, hidden_dim * 2)),
    }


def synthetic_transformer(key, srcs, masks, pos, query_embeds,
                          num_dec_layers, hidden_dim):
    # TODO(synk): the deformable transformer (MSDeformAttn encoder/decoder) is an
    # externally injected module; stubbed here with deterministic plain-JAX outputs.
    B = srcs[0].shape[0]
    Q = query_embeds.shape[0]
    k1, k2, k3, k4 = jax.random.split(key, 4)
    hs = jax.random.normal(k1, (num_dec_layers, B, Q, hidden_dim), jnp.float32)
    init_reference = jax.nn.sigmoid(jax.random.normal(k2, (B, Q, 2), jnp.float32))
    inter_references = jax.nn.sigmoid(
        jax.random.normal(k3, (num_dec_layers, B, Q, 2), jnp.float32))
    total_hw = sum(s.shape[2] * s.shape[3] for s in srcs)
    enc_memory = jax.random.normal(k4, (B, total_hw, hidden_dim), jnp.float32)
    return hs, init_reference, inter_references, None, None, enc_memory


def deformable_detr_after_backbone_forward(params, srcs, masks, pos,
                                           transformer_outputs, aux_loss=True):
    # ---- progress head (use_progress=True): fused masked pooling + linear ----
    progress_score = pool_progress_pallas(
        srcs, masks, params["progress_w"], params["progress_b"])      # (B, 3)

    hs, init_reference, inter_references, _, _, enc_memory = transformer_outputs
    L = hs.shape[0]
    # per-level references (lvl 0 -> init_reference, lvl>0 -> inter[lvl-1])
    refs = jnp.concatenate([init_reference[None], inter_references[:L - 1]], axis=0)

    outputs_class, outputs_coord, amount_pred = detr_heads_pallas(hs, refs, params)

    out = {
        "pred_logits": outputs_class[-1],
        "pred_boxes": outputs_coord[-1],
        "hs_last": hs[-1],
        "enc_memory": enc_memory,
    }
    if aux_loss:
        out["aux_outputs"] = [{"pred_logits": a, "pred_boxes": b}
                              for a, b in zip(outputs_class[:-1], outputs_coord[:-1])]
    out["progress_score"] = progress_score
    out["amount_pred"] = amount_pred                                   # (B, Q, 1)
    return out


# ----------------------------------------------------------------------------
# Plain-JAX reference (for correctness check)
# ----------------------------------------------------------------------------

def ref_forward(params, srcs, masks, transformer_outputs, num_feature_levels):
    pooled = []
    for l in range(num_feature_levels):
        valid = (~masks[l]).astype(jnp.float32)[:, None, :, :]
        pooled.append(jnp.sum(srcs[l] * valid, axis=(2, 3)) /
                      jnp.sum(valid, axis=(2, 3)))
    progress = jnp.concatenate(pooled, axis=1) @ params["progress_w"] + params["progress_b"]
    hs, init_ref, inter_ref, _, _, _ = transformer_outputs
    L = hs.shape[0]
    clss, boxes = [], []
    for lvl in range(L):
        ref = init_ref if lvl == 0 else inter_ref[lvl - 1]
        rc = jnp.clip(ref, 0.0, 1.0)
        inv = jnp.log(jnp.maximum(rc, 1e-5) / jnp.maximum(1.0 - rc, 1e-5))
        x = hs[lvl]
        logits = x @ params["class_w"] + params["class_b"]
        h = jax.nn.relu(x @ params["bbox_w1"] + params["bbox_b1"])
        h = jax.nn.relu(h @ params["bbox_w2"] + params["bbox_b2"])
        tmp = h @ params["bbox_w3"] + params["bbox_b3"]
        tmp = tmp.at[..., :2].add(inv)
        clss.append(logits)
        boxes.append(jax.nn.sigmoid(tmp))
    scores = hs[-1] @ params["amount_w"] + params["amount_b"]
    preds = jax.nn.sigmoid(scores)
    w = jax.nn.softmax(hs[-1] @ params["amount_ww"] + params["amount_wb"], axis=2)
    amount = jnp.sum(preds * w, axis=2, keepdims=True)
    return {"pred_logits": clss[-1], "pred_boxes": boxes[-1],
            "all_logits": jnp.stack(clss), "all_boxes": jnp.stack(boxes),
            "progress_score": progress, "amount_pred": amount}


# ----------------------------------------------------------------------------
# Main
# ----------------------------------------------------------------------------

if __name__ == "__main__":
    B = 2
    hidden_dim = 32
    num_classes = 8
    num_queries = 16
    num_feature_levels = 2
    num_dec_layers = 3
    level_shapes = [(16, 16), (8, 8)]

    key = jax.random.PRNGKey(0)
    k_par, k_src, k_pos, k_trf = jax.random.split(key, 4)

    params = init_params(k_par, hidden_dim, num_classes,
                         num_feature_levels, num_queries)

    srcs, masks, pos = [], [], []
    src_keys = jax.random.split(k_src, num_feature_levels)
    pos_keys = jax.random.split(k_pos, num_feature_levels)
    for l, (H, W) in enumerate(level_shapes):
        srcs.append(jax.random.normal(src_keys[l], (B, hidden_dim, H, W), jnp.float32))
        m = jnp.zeros((B, H, W), bool)
        m = m.at[1, :, W // 2:].set(True)  # second image has right-half padding
        masks.append(m)
        pos.append(jax.random.normal(pos_keys[l], (B, hidden_dim, H, W), jnp.float32))

    transformer_outputs = synthetic_transformer(
        k_trf, srcs, masks, pos, params["query_embed"],
        num_dec_layers, hidden_dim)

    out = deformable_detr_after_backbone_forward(
        params, srcs, masks, pos, transformer_outputs, aux_loss=True)
    jax.block_until_ready(out)

    ref = ref_forward(params, srcs, masks, transformer_outputs, num_feature_levels)
    for name in ("pred_logits", "pred_boxes", "progress_score", "amount_pred"):
        if not jnp.allclose(out[name], ref[name], atol=2e-4, rtol=2e-4):
            raise AssertionError(f"mismatch in {name}")
    for i, aux in enumerate(out["aux_outputs"]):
        if not jnp.allclose(aux["pred_logits"], ref["all_logits"][i], atol=2e-4, rtol=2e-4):
            raise AssertionError(f"mismatch in aux logits {i}")
        if not jnp.allclose(aux["pred_boxes"], ref["all_boxes"][i], atol=2e-4, rtol=2e-4):
            raise AssertionError(f"mismatch in aux boxes {i}")

    assert out["pred_logits"].shape == (B, num_queries, num_classes)
    assert out["pred_boxes"].shape == (B, num_queries, 4)
    assert len(out["aux_outputs"]) == num_dec_layers - 1
    assert out["progress_score"].shape == (B, 3)
    assert out["amount_pred"].shape == (B, num_queries, 1)

    print("KERNEL_OK")
</pallas_src>

<mosaic_0001>
module attributes {stable_mosaic.version = 11 : i64} {
  func.func @kernel(%arg0: i32, %arg1: memref<2x32x256xf32, #tpu.memory_space<vmem>>, %arg2: memref<2x1x256xf32, #tpu.memory_space<vmem>>, %arg3: memref<2x32x64xf32, #tpu.memory_space<vmem>>, %arg4: memref<2x1x64xf32, #tpu.memory_space<vmem>>, %arg5: memref<64x128xf32, #tpu.memory_space<vmem>>, %arg6: memref<1x128xf32, #tpu.memory_space<vmem>>, %arg7: memref<2x128xf32, #tpu.memory_space<vmem>>) attributes {dimension_semantics = [#tpu.dimension_semantics<arbitrary>], iteration_bounds = array<i64: 1>, scalar_prefetch = 0 : i64, scratch_operands = 0 : i64, tpu.core_type = #tpu.core_type<tc>, window_params = [{pipeline_mode = #tpu.pipeline_mode<synchronous>, transform_indices = @transform_0, window_bounds = array<i64: 2, 32, 256>}, {pipeline_mode = #tpu.pipeline_mode<synchronous>, transform_indices = @transform_1, window_bounds = array<i64: 2, 1, 256>}, {pipeline_mode = #tpu.pipeline_mode<synchronous>, transform_indices = @transform_2, window_bounds = array<i64: 2, 32, 64>}, {pipeline_mode = #tpu.pipeline_mode<synchronous>, transform_indices = @transform_3, window_bounds = array<i64: 2, 1, 64>}, {pipeline_mode = #tpu.pipeline_mode<synchronous>, transform_indices = @transform_4, window_bounds = array<i64: 64, 128>}, {pipeline_mode = #tpu.pipeline_mode<synchronous>, transform_indices = @transform_5, window_bounds = array<i64: 1, 128>}, {pipeline_mode = #tpu.pipeline_mode<synchronous>, transform_indices = @transform_6, window_bounds = array<i64: 2, 128>}]} {
    %c0 = arith.constant 0 : index
    %c0_0 = arith.constant 0 : index
    %0 = vector.load %arg6[%c0, %c0_0] : memref<1x128xf32, #tpu.memory_space<vmem>>, vector<1x128xf32>
    %c0_1 = arith.constant 0 : index
    %c0_2 = arith.constant 0 : index
    %c0_3 = arith.constant 0 : index
    %1 = vector.load %arg1[%c0_1, %c0_2, %c0_3] : memref<2x32x256xf32, #tpu.memory_space<vmem>>, vector<2x32x256xf32>
    %c0_4 = arith.constant 0 : index
    %c0_5 = arith.constant 0 : index
    %c0_6 = arith.constant 0 : index
    %2 = vector.load %arg2[%c0_4, %c0_5, %c0_6] : memref<2x1x256xf32, #tpu.memory_space<vmem>>, vector<2x1x256xf32>
    %3 = vector.broadcast %2 : vector<2x1x256xf32> to vector<2x32x256xf32>
    %4 = arith.mulf %1, %3 : vector<2x32x256xf32>
    %cst = arith.constant dense<0.000000e+00> : vector<2x32xf32>
    %5 = vector.multi_reduction <add>, %4, %cst [2] : vector<2x32x256xf32> to vector<2x32xf32>
    %cst_7 = arith.constant dense<0.000000e+00> : vector<2x1xf32>
    %6 = vector.multi_reduction <add>, %2, %cst_7 [2] : vector<2x1x256xf32> to vector<2x1xf32>
    %7 = vector.broadcast %6 : vector<2x1xf32> to vector<2x32xf32>
    %8 = arith.divf %5, %7 : vector<2x32xf32>
    %c0_8 = arith.constant 0 : index
    %c0_9 = arith.constant 0 : index
    %9 = vector.load %arg5[%c0_8, %c0_9] : memref<64x128xf32, #tpu.memory_space<vmem>>, vector<32x128xf32>
    %cst_10 = arith.constant dense<0.000000e+00> : vector<2x128xf32>
    %10 = tpu.matmul %8, %9, %cst_10 {dimension_numbers = #tpu.dot_dimension_numbers<[1], [0], [0], [1], [0, 0, 1, 1], [], []>} : vector<2x32xf32>, vector<32x128xf32>, vector<2x128xf32> -> vector<2x128xf32>
    %11 = vector.broadcast %0 : vector<1x128xf32> to vector<2x128xf32>
    %12 = arith.addf %11, %10 : vector<2x128xf32>
    %c0_11 = arith.constant 0 : index
    %c0_12 = arith.constant 0 : index
    %c0_13 = arith.constant 0 : index
    %13 = vector.load %arg3[%c0_11, %c0_12, %c0_13] : memref<2x32x64xf32, #tpu.memory_space<vmem>>, vector<2x32x64xf32>
    %c0_14 = arith.constant 0 : index
    %c0_15 = arith.constant 0 : index
    %c0_16 = arith.constant 0 : index
    %14 = vector.load %arg4[%c0_14, %c0_15, %c0_16] : memref<2x1x64xf32, #tpu.memory_space<vmem>>, vector<2x1x64xf32>
    %15 = vector.broadcast %14 : vector<2x1x64xf32> to vector<2x32x64xf32>
    %16 = arith.mulf %13, %15 : vector<2x32x64xf32>
    %cst_17 = arith.constant dense<0.000000e+00> : vector<2x32xf32>
    %17 = vector.multi_reduction <add>, %16, %cst_17 [2] : vector<2x32x64xf32> to vector<2x32xf32>
    %cst_18 = arith.constant dense<0.000000e+00> : vector<2x1xf32>
    %18 = vector.multi_reduction <add>, %14, %cst_18 [2] : vector<2x1x64xf32> to vector<2x1xf32>
    %19 = vector.broadcast %18 : vector<2x1xf32> to vector<2x32xf32>
    %20 = arith.divf %17, %19 : vector<2x32xf32>
    %c32 = arith.constant 32 : index
    %c0_19 = arith.constant 0 : index
    %21 = vector.load %arg5[%c32, %c0_19] : memref<64x128xf32, #tpu.memory_space<vmem>>, vector<32x128xf32>
    %cst_20 = arith.constant dense<0.000000e+00> : vector<2x128xf32>
    %22 = tpu.matmul %20, %21, %cst_20 {dimension_numbers = #tpu.dot_dimension_numbers<[1], [0], [0], [1], [0, 0, 1, 1], [], []>} : vector<2x32xf32>, vector<32x128xf32>, vector<2x128xf32> -> vector<2x128xf32>
    %23 = arith.addf %12, %22 : vector<2x128xf32>
    %c0_21 = arith.constant 0 : index
    %c0_22 = arith.constant 0 : index
    %24 = vector.load %arg7[%c0_21, %c0_22] : memref<2x128xf32, #tpu.memory_space<vmem>>, vector<2x128xf32>
    tpu.vector_store %arg7[%c0_21, %c0_22], %23 {strides = array<i32>} : memref<2x128xf32, #tpu.memory_space<vmem>>, vector<2x128xf32>,
    return
  }
  func.func @transform_0(%arg0: i32) -> (i32, i32, i32) {
    %c0_i32 = arith.constant 0 : i32
    %c0_i32_0 = arith.constant 0 : i32
    %c0_i32_1 = arith.constant 0 : i32
    %c0_i32_2 = arith.constant 0 : i32
    return %c0_i32, %c0_i32_0, %c0_i32_1 : i32, i32, i32
  }
  func.func @transform_1(%arg0: i32) -> (i32, i32, i32) {
    %c0_i32 = arith.constant 0 : i32
    %c0_i32_0 = arith.constant 0 : i32
    %c0_i32_1 = arith.constant 0 : i32
    %c0_i32_2 = arith.constant 0 : i32
    return %c0_i32, %c0_i32_0, %c0_i32_1 : i32, i32, i32
  }
  func.func @transform_2(%arg0: i32) -> (i32, i32, i32) {
    %c0_i32 = arith.constant 0 : i32
    %c0_i32_0 = arith.constant 0 : i32
    %c0_i32_1 = arith.constant 0 : i32
    %c0_i32_2 = arith.constant 0 : i32
    return %c0_i32, %c0_i32_0, %c0_i32_1 : i32, i32, i32
  }
  func.func @transform_3(%arg0: i32) -> (i32, i32, i32) {
    %c0_i32 = arith.constant 0 : i32
    %c0_i32_0 = arith.constant 0 : i32
    %c0_i32_1 = arith.constant 0 : i32
    %c0_i32_2 = arith.constant 0 : i32
    return %c0_i32, %c0_i32_0, %c0_i32_1 : i32, i32, i32
  }
  func.func @transform_4(%arg0: i32) -> (i32, i32) {
    %c0_i32 = arith.constant 0 : i32
    %c0_i32_0 = arith.constant 0 : i32
    %c0_i32_1 = arith.constant 0 : i32
    return %c0_i32, %c0_i32_0 : i32, i32
  }
  func.func @transform_5(%arg0: i32) -> (i32, i32) {
    %c0_i32 = arith.constant 0 : i32
    %c0_i32_0 = arith.constant 0 : i32
    %c0_i32_1 = arith.constant 0 : i32
    return %c0_i32, %c0_i32_0 : i32, i32
  }
  func.func @transform_6(%arg0: i32) -> (i32, i32) {
    %c0_i32 = arith.constant 0 : i32
    %c0_i32_0 = arith.constant 0 : i32
    %c0_i32_1 = arith.constant 0 : i32
    return %c0_i32, %c0_i32_0 : i32, i32
  }
}

</mosaic_0001>

<llo_original>
// kernel: tpu_custom_call.1
$region0: #{tpu_custom_call.1}
  #allocation0 [shape = 'u32[]', space=smem, size = 0x4, offset = 0x4, fixed_abs, tag = 'smem constant byte address 0x4 - core index']
  #allocation1 [shape = 'u32[72,128]{1,0:T(1,128)}', space=vmem, size = 0x9000, scoped, tag = 'internal scratch']
  %s0 = inlined_call_operand.hbm [shape: f32[2,32,256], index: 0, kind: input, shape index: {}]
  %s1 = inlined_call_operand.hbm [shape: f32[2,1,256], index: 1, kind: input, shape index: {}]
  %s2 = inlined_call_operand.hbm [shape: f32[2,32,64], index: 2, kind: input, shape index: {}]
  %s3 = inlined_call_operand.vmem [shape: f32[2,1,64], index: 3, kind: input, shape index: {}]
  %s4 = inlined_call_operand.hbm [shape: f32[64,128], index: 4, kind: input, shape index: {}]
  %s5 = inlined_call_operand.vmem [shape: f32[1,128], index: 5, kind: input, shape index: {}]
  %s6 = inlined_call_operand.hbm [shape: f32[2,128], index: 6, kind: output, shape index: {}]
  %s7 = sld [smem:[#allocation0]]
  $region50: #{tpu_custom_call.1} parent=0
    _
  %s9 = ssub.s32 1, %s7
  %s10 = scalar_select 0, %s9, %s7
  $region1: #{tpu_custom_call.1} parent=0
    #allocation2 [shape = 'u8[65536]{0}', space=vmem, size = 0x10000, scoped, tag = 'input window, operand 0, single buffered']
    #allocation3 [shape = 's32[1]{0}', space=sflag, size = 0x4, scoped, tag = 'scoped memory for tpu_custom_call.1']
    #allocation4 [shape = 's32[1]{0}', space=sflag, size = 0x4, scoped, tag = 'scoped memory for tpu_custom_call.1']
    #allocation5 [shape = 'u8[2048]{0}', space=vmem, size = 0x800, scoped, tag = 'input window, operand 1, single buffered']
    #allocation6 [shape = 's32[1]{0}', space=sflag, size = 0x4, scoped, tag = 'scoped memory for tpu_custom_call.1']
    #allocation7 [shape = 'u8[32768]{0}', space=vmem, size = 0x8000, scoped, tag = 'input window, operand 2, single buffered']
    #allocation8 [shape = 'u8[32768]{0}', space=vmem, size = 0x8000, scoped, tag = 'input window, operand 4, single buffered']
    #allocation9 [shape = 's32[1]{0}', space=sflag, size = 0x4, scoped, tag = 'scoped memory for tpu_custom_call.1']
    #allocation10 [shape = 'u8[1024]{0}', space=vmem, size = 0x400, scoped, tag = 'output window, operand 0, single buffered']
    %11 = vsyncpa [#allocation3], 0
    %12 = vsyncpa [#allocation6], 0
    %13 = vsyncpa [#allocation9], 0
    %14 = vsyncpa [#allocation4], 0
    // Predicated region
    $region2: #{tpu_custom_call.1} parent=1 // pred_check
      _
    $region3: #{tpu_custom_call.1} parent=1 // pred_check_branch
      %16 = sbr.rel (0) target = $region5
    $region4: #{tpu_custom_call.1} parent=1 // pred_region
      %18 = vsyncadd [#allocation3], 0
      %s19 = sshll.u32 %s0, 4
      %s20 = int_to_ptr.hbm [resolvable:$true] %s19
      %s21 = sshll.u32 [#allocation2], 4
      %s22 = int_to_ptr.vmem [resolvable:$true] %s21
      %27 = dma.hbm_to_vmem [thread:$0]  %s20, 2048, %s22, [#allocation3], 256, 256, 16
    $region5: #{tpu_custom_call.1} parent=1 // pred_fallthru
      _
    // Predicated region
    $region6: #{tpu_custom_call.1} parent=1 // pred_check
      _
    $region7: #{tpu_custom_call.1} parent=1 // pred_check_branch
      %29 = sbr.rel (0) target = $region9
    $region8: #{tpu_custom_call.1} parent=1 // pred_region
      %31 = vsyncadd [#allocation6], 0
      %s32 = sshll.u32 %s1, 4
      %s33 = int_to_ptr.hbm [resolvable:$true] %s32
      %s34 = sshll.u32 [#allocation5], 4
      %s35 = int_to_ptr.vmem [resolvable:$true] %s34
      %40 = dma.hbm_to_vmem [thread:$0]  %s33, 64, %s35, [#allocation6], 32, 32, 2
    $region9: #{tpu_custom_call.1} parent=1 // pred_fallthru
      _
    // Predicated region
    $region10: #{tpu_custom_call.1} parent=1 // pred_check
      _
    $region11: #{tpu_custom_call.1} parent=1 // pred_check_branch
      %42 = sbr.rel (0) target = $region13
    $region12: #{tpu_custom_call.1} parent=1 // pred_region
      %44 = vsyncadd [#allocation6], 0
      %s45 = sshll.u32 %s2, 4
      %s46 = int_to_ptr.hbm [resolvable:$true] %s45
      %s47 = sshll.u32 [#allocation7], 4
      %s48 = int_to_ptr.vmem [resolvable:$true] %s47
      %53 = dma.hbm_to_vmem [thread:$0]  %s46, 1024, %s48, [#allocation6], 128, 128, 8
    $region13: #{tpu_custom_call.1} parent=1 // pred_fallthru
      _
    // Predicated region
    $region14: #{tpu_custom_call.1} parent=1 // pred_check
      _
    $region15: #{tpu_custom_call.1} parent=1 // pred_check_branch
      %55 = sbr.rel (0) target = $region17
    $region16: #{tpu_custom_call.1} parent=1 // pred_region
      _
    $region17: #{tpu_custom_call.1} parent=1 // pred_fallthru
      _
    // Predicated region
    $region18: #{tpu_custom_call.1} parent=1 // pred_check
      _
    $region19: #{tpu_custom_call.1} parent=1 // pred_check_branch
      %57 = sbr.rel (0) target = $region21
    $region20: #{tpu_custom_call.1} parent=1 // pred_region
      %59 = vsyncadd [#allocation9], 0
      %s60 = sshll.u32 %s4, 4
      %s61 = int_to_ptr.hbm [resolvable:$true] %s60
      %s62 = sshll.u32 [#allocation8], 4
      %s63 = int_to_ptr.vmem [resolvable:$true] %s62
      %68 = dma.hbm_to_vmem [thread:$0]  %s61, 1024, %s63, [#allocation9], 128, 128, 8
    $region21: #{tpu_custom_call.1} parent=1 // pred_fallthru
      _
    // Predicated region
    $region22: #{tpu_custom_call.1} parent=1 // pred_check
      _
    $region23: #{tpu_custom_call.1} parent=1 // pred_check_branch
      %70 = sbr.rel (0) target = $region25
    $region24: #{tpu_custom_call.1} parent=1 // pred_region
      _
    $region25: #{tpu_custom_call.1} parent=1 // pred_fallthru
      _
    // Predicated region
    $region26: #{tpu_custom_call.1} parent=1 // pred_check
      _
    $region27: #{tpu_custom_call.1} parent=1 // pred_check_branch
      %72 = sbr.rel (0) target = $region29
    $region28: #{tpu_custom_call.1} parent=1 // pred_region
      %74 = dma.done [#allocation3], 2048
    $region29: #{tpu_custom_call.1} parent=1 // pred_fallthru
      _
    // Predicated region
    $region30: #{tpu_custom_call.1} parent=1 // pred_check
      _
    $region31: #{tpu_custom_call.1} parent=1 // pred_check_branch
      %76 = sbr.rel (0) target = $region33
    $region32: #{tpu_custom_call.1} parent=1 // pred_region
      %78 = dma.done [#allocation6], 64
    $region33: #{tpu_custom_call.1} parent=1 // pred_fallthru
      _
    // Predicated region
    $region34: #{tpu_custom_call.1} parent=1 // pred_check
      _
    $region35: #{tpu_custom_call.1} parent=1 // pred_check_branch
      %80 = sbr.rel (0) target = $region37
    $region36: #{tpu_custom_call.1} parent=1 // pred_region
      %82 = dma.done [#allocation6], 1024
    $region37: #{tpu_custom_call.1} parent=1 // pred_fallthru
      _
    // Predicated region
    $region38: #{tpu_custom_call.1} parent=1 // pred_check
      _
    $region39: #{tpu_custom_call.1} parent=1 // pred_check_branch
      %84 = sbr.rel (0) target = $region41
    $region40: #{tpu_custom_call.1} parent=1 // pred_region
      %86 = dma.done [#allocation9], 1024
    $region41: #{tpu_custom_call.1} parent=1 // pred_fallthru
      _
    %v87 = vld [vmem:[%s5] sm:$0x1]
    %v88 = vld [vmem:[#allocation2] sm:$0xff]
    %v89 = vld [vmem:[#allocation2 + $0x8] sm:$0xff]
    %v90 = vld [vmem:[#allocation2 + $0x10] sm:$0xff]
    %v91 = vld [vmem:[#allocation2 + $0x18] sm:$0xff]
    %v92 = vld [vmem:[#allocation2 + $0x20] sm:$0xff]
    %v93 = vld [vmem:[#allocation2 + $0x28] sm:$0xff]
    %v94 = vld [vmem:[#allocation2 + $0x30] sm:$0xff]
    %v95 = vld [vmem:[#allocation2 + $0x38] sm:$0xff]
    %v96 = vld [vmem:[#allocation2 + $0x40] sm:$0xff]
    %v97 = vld [vmem:[#allocation2 + $0x48] sm:$0xff]
    %v98 = vld [vmem:[#allocation2 + $0x50] sm:$0xff]
    %v99 = vld [vmem:[#allocation2 + $0x58] sm:$0xff]
    %v100 = vld [vmem:[#allocation2 + $0x60] sm:$0xff]
    %v101 = vld [vmem:[#allocation2 + $0x68] sm:$0xff]
    %v102 = vld [vmem:[#allocation2 + $0x70] sm:$0xff]
    %v103 = vld [vmem:[#allocation2 + $0x78] sm:$0xff]
    %v104 = vld [vmem:[#allocation5] sm:$0x3]
    %v105 = vld [vmem:[#allocation5 + $0x2] sm:$0x3]
    %v108 = vperm.slane %v104, 0
    %v109 = vperm.slane %v104, 1
    %v110 = vperm.slane %v105, 0
    %v111 = vperm.slane %v105, 1
    %v116 = vmul.f32 %v88, %v108
    %v117 = vmul.f32 %v89, %v109
    %v118 = vmul.f32 %v90, %v108
    %v119 = vmul.f32 %v91, %v109
    %v120 = vmul.f32 %v92, %v108
    %v121 = vmul.f32 %v93, %v109
    %v122 = vmul.f32 %v94, %v108
    %v123 = vmul.f32 %v95, %v109
    %v124 = vmul.f32 %v96, %v110
    %v125 = vmul.f32 %v97, %v111
    %v126 = vmul.f32 %v98, %v110
    %v127 = vmul.f32 %v99, %v111
    %v128 = vmul.f32 %v100, %v110
    %v129 = vmul.f32 %v101, %v111
    %v130 = vmul.f32 %v102, %v110
    %v131 = vmul.f32 %v103, %v111
    %v132 = vadd.f32 %v116, %v117
    %133 = vadd.xlane.f32.xlu0 %v132
    %v134 = vpop.xlane.xlu0 %133
    %v135 = vadd.f32 %v118, %v119
    %136 = vadd.xlane.f32.xlu0 %v135
    %v137 = vpop.xlane.xlu0 %136
    %v138 = vadd.f32 %v120, %v121
    %139 = vadd.xlane.f32.xlu0 %v138
    %v140 = vpop.xlane.xlu0 %139
    %v141 = vadd.f32 %v122, %v123
    %142 = vadd.xlane.f32.xlu0 %v141
    %v143 = vpop.xlane.xlu0 %142
    %v144 = vadd.f32 %v124, %v125
    %145 = vadd.xlane.f32.xlu0 %v144
    %v146 = vpop.xlane.xlu0 %145
    %v147 = vadd.f32 %v126, %v127
    %148 = vadd.xlane.f32.xlu0 %v147
    %v149 = vpop.xlane.xlu0 %148
    %v150 = vadd.f32 %v128, %v129
    %151 = vadd.xlane.f32.xlu0 %v150
    %v152 = vpop.xlane.xlu0 %151
    %v153 = vadd.f32 %v130, %v131
    %154 = vadd.xlane.f32.xlu0 %v153
    %v155 = vpop.xlane.xlu0 %154
    %vm156 = vcmask 1040384
    %v157 = vsel %vm156, %v108, 0.0
    %v158 = vsel %vm156, %v109, 0.0
    %v159 = vadd.f32 %v157, %v158
    %160 = vadd.xlane.f32.xlu0 %v159
    %v161 = vpop.xlane.xlu0 %160
    %v162 = vsel %vm156, %v110, 0.0
    %v163 = vsel %vm156, %v111, 0.0
    %v164 = vadd.f32 %v162, %v163
    %165 = vadd.xlane.f32.xlu0 %v164
    %v166 = vpop.xlane.xlu0 %165
    %v167 = vperm.slane %v161, 0
    %v168 = vperm.slane %v166, 0
    %v169 = vrcp.pop %v167
    %v170 = vmul.f32 %v167, %v169
    %v171 = vsub.f32 1.0, %v170
    %v172 = vmul.f32 %v169, %v171
    %v173 = vadd.f32 %v169, %v172
    %vm174 = vweird.f32 %v167
    %vm175 = vweird.f32 %v169
    %vm176 = vmor %vm174, %vm175
    %v177 = vsel %vm176, %v169, %v173
    %v178 = vand.u32 2147483647, %v167
    %vm179 = vcmp.eq.f32.partialorder %v178, 8.507059e+37
    %v180 = vand.u32 %v167, 2147483648
    %v181 = vor.u32 1.1754944e-38, %v180
    %v182 = vsel %vm179, %v181, %v177
    %v183 = vmul.f32 %v134, %v182
    %v184 = vmul.f32 %v137, %v182
    %v185 = vmul.f32 %v140, %v182
    %v186 = vmul.f32 %v143, %v182
    %v187 = vrcp.pop %v168
    %v188 = vmul.f32 %v168, %v187
    %v189 = vsub.f32 1.0, %v188
    %v190 = vmul.f32 %v187, %v189
    %v191 = vadd.f32 %v187, %v190
    %vm192 = vweird.f32 %v168
    %vm193 = vweird.f32 %v187
    %vm194 = vmor %vm192, %vm193
    %v195 = vsel %vm194, %v187, %v191
    %v196 = vand.u32 2147483647, %v168
    %vm197 = vcmp.eq.f32.partialorder %v196, 8.507059e+37
    %v198 = vand.u32 %v168, 2147483648
    %v199 = vor.u32 1.1754944e-38, %v198
    %v200 = vsel %vm197, %v199, %v195
    %v201 = vmul.f32 %v146, %v200
    %v202 = vmul.f32 %v149, %v200
    %v203 = vmul.f32 %v152, %v200
    %v204 = vmul.f32 %v155, %v200
    %v205 = vld [vmem:[#allocation8] sm:$0xff]
    %v206 = vld [vmem:[#allocation8 + $0x8] sm:$0xff]
    %v207 = vld [vmem:[#allocation8 + $0x10] sm:$0xff]
    %v208 = vld [vmem:[#allocation8 + $0x18] sm:$0xff]
    %v217 = vlaneseq
    %v218 = vand.u32 %v217, 127
    %v219 = vperm.slane %v183, %v218
    %v220 = vadd.s32 %v218, 4294967288
    %v221 = vperm.slane %v184, %v220
    %vm222 = vcmask 130112
    %v223 = vsel %vm222, %v221, %v219
    %v224 = vadd.s32 %v218, 4294967280
    %v225 = vperm.slane %v185, %v224
    %vm226 = vcmask 195712
    %v227 = vsel %vm226, %v225, %v223
    %v228 = vadd.s32 %v218, 4294967272
    %v229 = vperm.slane %v186, %v228
    %vm230 = vcmask 261312
    %v231 = vsel %vm230, %v229, %v227
    %v232 = vperm.slane %v201, %v218
    %v233 = vperm.slane %v202, %v220
    %v234 = vsel %vm222, %v233, %v232
    %v235 = vperm.slane %v203, %v224
    %v236 = vsel %vm226, %v235, %v234
    %v237 = vperm.slane %v204, %v228
    %v238 = vsel %vm230, %v237, %v236
    %vm239 = vcmask 1041409
    %v240 = vsel %vm239, %v238, %v231
    %vm241 = vcmask 261120
    %v242 = vsel %vm241, %v240, 0
    %244 = vmatpush.msra.mxu0 0.0
    %245 = vmatpush.msra.mxu0 0.0
    %246 = vmatpush.msra.mxu0 0.0
    %247 = vmatpush.msra.mxu0 0.0
    %248 = vmatpush.msra.mxu0 0.0
    %249 = vmatpush.msra.mxu0 0.0
    %250 = vmatpush.msra.mxu0 0.0
    %251 = vmatpush.msra.mxu0 0.0
    %252 = vmatpush.msra.mxu0 0.0
    %253 = vmatpush.msra.mxu0 0.0
    %254 = vmatpush.msra.mxu0 0.0
    %255 = vmatpush.msra.mxu0 0.0
    %256 = vmatpush.msra.mxu0 %v208
    %257 = vmatpush.msra.mxu0 %v207
    %258 = vmatpush.msra.mxu0 %v206
    %259 = vmatpush.msra.mxu0 %v205
    %260 = vmatmul.f32.gmra.mxu0 %v242
    %v261 = vpop.f32.mrf.mxu0
    %v262 = vadd.f32 0.0, %v261
    %263 = vdwg.mxu0
    %v265 = vperm.slane %v87, 0
    %v267 = vadd.f32 %v265, %v262
    %v268 = vld [vmem:[#allocation7] sm:$0xff]
    %v269 = vld [vmem:[#allocation7 + $0x8] sm:$0xff]
    %v270 = vld [vmem:[#allocation7 + $0x10] sm:$0xff]
    %v271 = vld [vmem:[#allocation7 + $0x18] sm:$0xff]
    %v272 = vld [vmem:[#allocation7 + $0x20] sm:$0xff]
    %v273 = vld [vmem:[#allocation7 + $0x28] sm:$0xff]
    %v274 = vld [vmem:[#allocation7 + $0x30] sm:$0xff]
    %v275 = vld [vmem:[#allocation7 + $0x38] sm:$0xff]
    %v276 = vld [vmem:[%s3] sm:$0x1]
    %v277 = vld [vmem:[%s3 + $0x1] sm:$0x1]
    %v280 = vperm.slane %v276, 0
    %v281 = vperm.slane %v277, 0
    %v284 = vmul.f32 %v268, %v280
    %v285 = vmul.f32 %v269, %v280
    %v286 = vmul.f32 %v270, %v280
    %v287 = vmul.f32 %v271, %v280
    %v288 = vmul.f32 %v272, %v281
    %v289 = vmul.f32 %v273, %v281
    %v290 = vmul.f32 %v274, %v281
    %v291 = vmul.f32 %v275, %v281
    %vm292 = vcmask 523264
    %v293 = vsel %vm292, %v284, 0.0
    %294 = vadd.xlane.f32.xlu0 %v293
    %v295 = vpop.xlane.xlu0 %294
    %v296 = vsel %vm292, %v285, 0.0
    %297 = vadd.xlane.f32.xlu0 %v296
    %v298 = vpop.xlane.xlu0 %297
    %v299 = vsel %vm292, %v286, 0.0
    %300 = vadd.xlane.f32.xlu0 %v299
    %v301 = vpop.xlane.xlu0 %300
    %v302 = vsel %vm292, %v287, 0.0
    %303 = vadd.xlane.f32.xlu0 %v302
    %v304 = vpop.xlane.xlu0 %303
    %v305 = vsel %vm292, %v288, 0.0
    %306 = vadd.xlane.f32.xlu0 %v305
    %v307 = vpop.xlane.xlu0 %306
    %v308 = vsel %vm292, %v289, 0.0
    %309 = vadd.xlane.f32.xlu0 %v308
    %v310 = vpop.xlane.xlu0 %309
    %v311 = vsel %vm292, %v290, 0.0
    %312 = vadd.xlane.f32.xlu0 %v311
    %v313 = vpop.xlane.xlu0 %312
    %v314 = vsel %vm292, %v291, 0.0
    %315 = vadd.xlane.f32.xlu0 %v314
    %v316 = vpop.xlane.xlu0 %315
    %vm317 = vcmask 516096
    %v318 = vsel %vm317, %v276, 0.0
    %319 = vadd.xlane.f32.xlu0 %v318
    %v320 = vpop.xlane.xlu0 %319
    %v321 = vsel %vm317, %v277, 0.0
    %322 = vadd.xlane.f32.xlu0 %v321
    %v323 = vpop.xlane.xlu0 %322
    %v324 = vperm.slane %v320, 0
    %v325 = vperm.slane %v323, 0
    %v326 = vrcp.pop %v324
    %v327 = vmul.f32 %v324, %v326
    %v328 = vsub.f32 1.0, %v327
    %v329 = vmul.f32 %v326, %v328
    %v330 = vadd.f32 %v326, %v329
    %vm331 = vweird.f32 %v324
    %vm332 = vweird.f32 %v326
    %vm333 = vmor %vm331, %vm332
    %v334 = vsel %vm333, %v326, %v330
    %v335 = vand.u32 2147483647, %v324
    %vm336 = vcmp.eq.f32.partialorder %v335, 8.507059e+37
    %v337 = vand.u32 %v324, 2147483648
    %v338 = vor.u32 1.1754944e-38, %v337
    %v339 = vsel %vm336, %v338, %v334
    %v340 = vmul.f32 %v295, %v339
    %v341 = vmul.f32 %v298, %v339
    %v342 = vmul.f32 %v301, %v339
    %v343 = vmul.f32 %v304, %v339
    %v344 = vrcp.pop %v325
    %v345 = vmul.f32 %v325, %v344
    %v346 = vsub.f32 1.0, %v345
    %v347 = vmul.f32 %v344, %v346
    %v348 = vadd.f32 %v344, %v347
    %vm349 = vweird.f32 %v325
    %vm350 = vweird.f32 %v344
    %vm351 = vmor %vm349, %vm350
    %v352 = vsel %vm351, %v344, %v348
    %v353 = vand.u32 2147483647, %v325
    %vm354 = vcmp.eq.f32.partialorder %v353, 8.507059e+37
    %v355 = vand.u32 %v325, 2147483648
    %v356 = vor.u32 1.1754944e-38, %v355
    %v357 = vsel %vm354, %v356, %v352
    %v358 = vmul.f32 %v307, %v357
    %v359 = vmul.f32 %v310, %v357
    %v360 = vmul.f32 %v313, %v357
    %v361 = vmul.f32 %v316, %v357
    %v362 = vld [vmem:[#allocation8 + $0x20] sm:$0xff]
    %v363 = vld [vmem:[#allocation8 + $0x28] sm:$0xff]
    %v364 = vld [vmem:[#allocation8 + $0x30] sm:$0xff]
    %v365 = vld [vmem:[#allocation8 + $0x38] sm:$0xff]
    %v374 = vperm.slane %v340, %v218
    %v375 = vperm.slane %v341, %v220
    %v376 = vsel %vm222, %v375, %v374
    %v377 = vperm.slane %v342, %v224
    %v378 = vsel %vm226, %v377, %v376
    %v379 = vperm.slane %v343, %v228
    %v380 = vsel %vm230, %v379, %v378
    %v381 = vperm.slane %v358, %v218
    %v382 = vperm.slane %v359, %v220
    %v383 = vsel %vm222, %v382, %v381
    %v384 = vperm.slane %v360, %v224
    %v385 = vsel %vm226, %v384, %v383
    %v386 = vperm.slane %v361, %v228
    %v387 = vsel %vm230, %v386, %v385
    %v388 = vsel %vm239, %v387, %v380
    %v389 = vsel %vm241, %v388, 0
    %391 = vmatpush.msra.mxu0 0.0
    %392 = vmatpush.msra.mxu0 0.0
    %393 = vmatpush.msra.mxu0 0.0
    %394 = vmatpush.msra.mxu0 0.0
    %395 = vmatpush.msra.mxu0 0.0
    %396 = vmatpush.msra.mxu0 0.0
    %397 = vmatpush.msra.mxu0 0.0
    %398 = vmatpush.msra.mxu0 0.0
    %399 = vmatpush.msra.mxu0 0.0
    %400 = vmatpush.msra.mxu0 0.0
    %401 = vmatpush.msra.mxu0 0.0
    %402 = vmatpush.msra.mxu0 0.0
    %403 = vmatpush.msra.mxu0 %v365
    %404 = vmatpush.msra.mxu0 %v364
    %405 = vmatpush.msra.mxu0 %v363
    %406 = vmatpush.msra.mxu0 %v362
    %407 = vmatmul.f32.gmra.mxu0 %v389
    %v408 = vpop.f32.mrf.mxu0
    %v409 = vadd.f32 0.0, %v408
    %410 = vdwg.mxu0
    %v411 = vadd.f32 %v267, %v409
    %412 = vst [vmem:[#allocation10] sm:$0x3] %v411
    // Predicated region
    $region42: #{tpu_custom_call.1} parent=1 // pred_check
      _
    $region43: #{tpu_custom_call.1} parent=1 // pred_check_branch
      %414 = sbr.rel (0) target = $region45
    $region44: #{tpu_custom_call.1} parent=1 // pred_region
      %416 = vsyncadd [#allocation4], 0
      %s418 = sshll.u32 [#allocation10], 4
      %s419 = int_to_ptr.vmem [resolvable:$true] %s418
      %s420 = sshll.u32 %s6, 4
      %s421 = int_to_ptr.hbm [resolvable:$true] %s420
      %423 = dma.vmem_to_hbm [thread:$0]  %s419, 32, %s421, [#allocation4]
    $region45: #{tpu_custom_call.1} parent=1 // pred_fallthru
      _
    // Predicated region
    $region46: #{tpu_custom_call.1} parent=1 // pred_check
      _
    $region47: #{tpu_custom_call.1} parent=1 // pred_check_branch
      %425 = sbr.rel (0) target = $region49
    $region48: #{tpu_custom_call.1} parent=1 // pred_region
      %427 = dma.done [#allocation4], 32
    $region49: #{tpu_custom_call.1} parent=1 // pred_fallthru
      _
    %428 = vsyncpa [#allocation3], 1
    %429 = vsyncpa [#allocation6], 1
    %430 = vsyncpa [#allocation9], 1
    %431 = vsyncpa [#allocation4], 1

</llo_original>
